<compile_context>
chip_gen: v7x
topology: tpu7x:2x2x1
jax: 0.10.0
libtpu: 0.0.40
codegen_flags: <defaults>
</compile_context>

<pallas_src>
import functools

import jax
import jax.numpy as jnp
from jax.experimental import pallas as pl
from jax.experimental.pallas import tpu as pltpu

_LANE = 128     # lane width (last dim)
_SUBLANE = 8    # f32 sublane width (second-to-last dim)
_MIB = 1024 * 1024


def _cdiv(a, b):
    return -(-a // b)


def _round_up(n, m):
    return ((n + m - 1) // m) * m


def _vmem_capacity_bytes():
    try:
        return int(pltpu.get_tpu_info().vmem_capacity_bytes)
    except Exception:
        return 64 * _MIB  # conservative (v7x) floor


def _pad2(a, rows, cols):
    pr, pc = rows - a.shape[0], cols - a.shape[1]
    if pr == 0 and pc == 0:
        return a  # avoid a no-op HBM copy
    return jnp.pad(a, ((0, pr), (0, pc)))


# ----------------------------------------------------------------------------
# Kernels
# ----------------------------------------------------------------------------
def _fused_mlp_kernel(*refs, num_layers):
    """refs = (x, w0, b0, w1, b1, ..., out0, ..., out{L-1}).

    Whole MLP in one body; intermediates never leave VMEM/vregs.  MXU inputs
    use the weights' dtype (bf16 if requested); accumulation and the bias/ReLU
    epilogue are f32.
    """
    x_ref = refs[0]
    w_refs = [refs[1 + 2 * i] for i in range(num_layers)]
    b_refs = [refs[2 + 2 * i] for i in range(num_layers)]
    out_refs = refs[1 + 2 * num_layers:]

    h = x_ref[...]
    for i in range(num_layers):
        lhs = h if h.dtype == w_refs[i].dtype else h.astype(w_refs[i].dtype)
        y = jnp.dot(lhs, w_refs[i][...], preferred_element_type=jnp.float32)
        y = y + b_refs[i][...].astype(jnp.float32)   # (1, out) broadcasts
        if i != num_layers - 1:
            y = jnp.maximum(y, 0.0)                  # f32 epilogue
        out_refs[i][...] = y.astype(out_refs[i].dtype)
        h = y


def _linear_kernel(x_ref, w_ref, b_ref, o_ref, *, apply_relu):
    """One linear (+ optional ReLU) layer; used by the per-layer fallback."""
    x = x_ref[...]
    if x.dtype != w_ref.dtype:
        x = x.astype(w_ref.dtype)
    y = jnp.dot(x, w_ref[...], preferred_element_type=jnp.float32)
    y = y + b_ref[...].astype(jnp.float32)
    if apply_relu:
        y = jnp.maximum(y, 0.0)
    o_ref[...] = y.astype(o_ref.dtype)


# ----------------------------------------------------------------------------
# Wrapper
# ----------------------------------------------------------------------------
def mlp_forward(x, params, *, batch_tile=512, single_shot_rows=512,
                compute_dtype=jnp.bfloat16, input_scale=None,
                force_per_layer=False):
    """x: [B, In]; params: list of (w: [in, out], b: [out]).

    Returns the list of per-layer states (same semantics as Model.forward).
    input_scale (e.g. 1/256) is folded into W0 so preproc's scaling costs no
    extra HBM pass.  compute_dtype=None keeps exact f32 matmuls.
    """
    B, in_dim = x.shape
    L = len(params)
    out_dtype = x.dtype
    dims = [in_dim] + [w.shape[1] for w, _ in params]
    pdims = [_round_up(d, _LANE) for d in dims]
    mx_dtype = jnp.dtype(compute_dtype) if compute_dtype is not None else jnp.dtype(x.dtype)

    # --- batch tiling: minimize padding (pad rows < 8 per grid step) ---------
    if B <= single_shot_rows:
        n_steps = 1
        tile = _round_up(B, _SUBLANE)
    else:
        n_steps = _cdiv(B, batch_tile)           # >= 2 -> both v7x TCs get work
        tile = _round_up(_cdiv(B, n_steps), _SUBLANE)
    b_pad = n_steps * tile

    # --- host-side prep: fold preproc scale, cast MXU operands, zero-pad -----
    x_p = _pad2(x.astype(mx_dtype), b_pad, pdims[0])
    flat_wb = []
    for i, (w, b) in enumerate(params):
        if i == 0 and input_scale is not None:
            w = w * input_scale                   # x/256 @ W  ==  x @ (W/256)
        w_p = _pad2(w.astype(mx_dtype), pdims[i], pdims[i + 1])
        b_p = _pad2(b.reshape(1, -1).astype(jnp.float32), 1, pdims[i + 1])
        flat_wb += [w_p, b_p]

    kernel = functools.partial(_fused_mlp_kernel, num_layers=L)
    out_shape = tuple(
        jax.ShapeDtypeStruct((b_pad, pdims[i + 1]), out_dtype) for i in range(L))

    # --- cost estimate & VMEM budgeting --------------------------------------
    w_isz = jnp.dtype(mx_dtype).itemsize
    o_isz = jnp.dtype(out_dtype).itemsize
    flops = 2 * b_pad * sum(pdims[i] * pdims[i + 1] for i in range(L))
    bytes_accessed = (x_p.size * x_p.dtype.itemsize
                      + sum(a.size * a.dtype.itemsize for a in flat_wb)
                      + sum(b_pad * pdims[i + 1] * o_isz for i in range(L)))
    cost = pl.CostEstimate(flops=flops, transcendentals=0,
                           bytes_accessed=bytes_accessed)

    def fused_vmem(weight_bufs, io_bufs):
        wb = sum(pdims[i] * pdims[i + 1] for i in range(L)) * w_isz * weight_bufs
        bb = sum(pdims[i + 1] for i in range(L)) * 4 * weight_bufs
        xb = tile * pdims[0] * w_isz * io_bufs
        ob = sum(tile * pdims[i + 1] for i in range(L)) * o_isz * io_bufs
        scratch = 2 * tile * max(pdims) * 4       # f32 intermediates headroom
        return wb + bb + xb + ob + scratch

    cap = _vmem_capacity_bytes()
    budget = int(cap * 0.85)

    def vmem_limit(need):
        return int(min(cap, max(2 * need, 32 * _MIB)))

    use_per_layer = force_per_layer or (
        fused_vmem(1, 2 if n_steps > 1 else 1) > budget)

    # --- path 1: small batch, everything resident, no grid/pipeline ----------
    if not use_per_layer and n_steps == 1:
        need = fused_vmem(1, 1)
        vmem = pl.BlockSpec(memory_space=pltpu.MemorySpace.VMEM)
        outs = pl.pallas_call(
            kernel,
            out_shape=out_shape,
            in_specs=[vmem] * (1 + 2 * L),
            out_specs=tuple(vmem for _ in range(L)),
            cost_estimate=cost,
            compiler_params=pltpu.CompilerParams(
                vmem_limit_bytes=vmem_limit(need)),
        )(x_p, *flat_wb)

    # --- path 2: batch-tiled grid, weights resident across steps -------------
    elif not use_per_layer:
        def run(single_buffer_weights):
            wkw = {}
            if single_buffer_weights and hasattr(pl, "Buffered"):
                # Constant index_map -> no need to double-buffer weights/biases.
                wkw = dict(pipeline_mode=pl.Buffered(1))
            in_specs = [pl.BlockSpec((tile, pdims[0]), lambda g: (g, 0))]
            for li in range(L):
                in_specs.append(pl.BlockSpec((pdims[li], pdims[li + 1]),
                                             lambda g: (0, 0), **wkw))
                in_specs.append(pl.BlockSpec((1, pdims[li + 1]),
                                             lambda g: (0, 0), **wkw))
            out_specs = tuple(
                pl.BlockSpec((tile, pdims[li + 1]), lambda g: (g, 0))
                for li in range(L))
            need = fused_vmem(1 if single_buffer_weights else 2, 2)
            return pl.pallas_call(
                kernel,
                out_shape=out_shape,
                grid=(n_steps,),
                in_specs=in_specs,
                out_specs=out_specs,
                cost_estimate=cost,
                compiler_params=pltpu.CompilerParams(
                    dimension_semantics=("parallel",),
                    vmem_limit_bytes=vmem_limit(need)),
            )(x_p, *flat_wb)

        try:
            outs = run(True)     # weights/biases single-buffered (half VMEM)
        except Exception:
            outs = run(False)    # conservative fallback: default buffering

    # --- path 3: per-layer fallback when resident weights exceed VMEM --------
    else:
        # TODO(synk): if a single layer's padded weight still exceeds VMEM,
        # add a K/N-tiling grid axis with an accumulator scratch here.
        outs = []
        h = x_p
        for li in range(L):
            w_p, b_p = flat_wb[2 * li], flat_wb[2 * li + 1]
            lin_kernel = functools.partial(_linear_kernel,
                                           apply_relu=(li != L - 1))
            need = (pdims[li] * pdims[li + 1] * w_isz
                    + 2 * tile * (pdims[li] + pdims[li + 1]) * 4) + 2 * _MIB
            out = pl.pallas_call(
                lin_kernel,
                out_shape=jax.ShapeDtypeStruct((b_pad, pdims[li + 1]), out_dtype),
                grid=(n_steps,),
                in_specs=[pl.BlockSpec((tile, pdims[li]), lambda g: (g, 0)),
                          pl.BlockSpec((pdims[li], pdims[li + 1]),
                                       lambda g: (0, 0)),
                          pl.BlockSpec((1, pdims[li + 1]), lambda g: (0, 0))],
                out_specs=pl.BlockSpec((tile, pdims[li + 1]), lambda g: (g, 0)),
                compiler_params=pltpu.CompilerParams(
                    dimension_semantics=("parallel",),
                    vmem_limit_bytes=vmem_limit(need)),
            )(h, w_p, b_p)
            outs.append(out)
            h = out

    # Strip batch / lane padding to recover the exact per-layer state shapes.
    return [outs[i][:B, :dims[i + 1]] for i in range(L)]


def init_mlp_params(key, input_dim, hidden_sizes, num_labels, dtype=jnp.float32):
    """Matches nn.Linear init (uniform +/- 1/sqrt(fan_in)); weights stored as
    [in, out] (pre-transposed vs PyTorch's [out, in])."""
    sizes = [input_dim] + list(hidden_sizes) + [num_labels]
    params = []
    for fan_in, fan_out in zip(sizes[:-1], sizes[1:]):
        key, kw, kb = jax.random.split(key, 3)
        bound = 1.0 / (fan_in ** 0.5)
        w = jax.random.uniform(kw, (fan_in, fan_out), dtype, -bound, bound)
        b = jax.random.uniform(kb, (fan_out,), dtype, -bound, bound)
        params.append((w, b))
    return params


def preproc(x):
    """Model.preproc: scale by 1/256 and flatten.  Prefer folding the scale
    into W0 via mlp_forward(..., input_scale=1/256) to avoid an extra HBM pass."""
    x = x / 256.0
    return x.reshape(x.shape[0], -1)


if __name__ == "__main__":
    key = jax.random.PRNGKey(0)

    batch = 8
    input_dim = 32
    hidden_sizes = [64, 32]
    num_labels = 16

    key, kx, kp = jax.random.split(key, 3)
    x = jax.random.normal(kx, (batch, input_dim), jnp.float32)
    params = init_mlp_params(kp, input_dim, hidden_sizes, num_labels)

    def reference(xr):
        states, h = [], xr
        for i, (w, b) in enumerate(params):
            h = h @ w + b
            if i != len(params) - 1:
                h = jnp.maximum(h, 0.0)
            states.append(h)
        return states

    ref_small = reference(x)

    # 1) Small batch, exact f32 matmuls, single fused invocation (no grid).
    states = jax.block_until_ready(mlp_forward(x, params, compute_dtype=None))
    for got, want in zip(states, ref_small):
        assert got.shape == want.shape
        assert jnp.allclose(got, want, atol=2e-5, rtol=2e-5)

    # 2) Small batch, bf16 MXU inputs (default), f32 accumulate/epilogue.
    states_bf16 = jax.block_until_ready(mlp_forward(x, params))
    for got, want in zip(states_bf16, ref_small):
        assert got.shape == want.shape
        assert jnp.allclose(got, want, atol=3e-2, rtol=3e-2)

    # 3) Larger batch -> batch-tiled "parallel" grid, resident single-buffered
    #    weights (B=300 -> 3 steps of 104 rows, only 12 padded rows).
    key, kx2 = jax.random.split(key)
    x2 = jax.random.normal(kx2, (300, input_dim), jnp.float32)
    ref_big = reference(x2)
    states2 = jax.block_until_ready(
        mlp_forward(x2, params, batch_tile=128, single_shot_rows=64,
                    compute_dtype=None))
    for got, want in zip(states2, ref_big):
        assert got.shape == want.shape
        assert jnp.allclose(got, want, atol=2e-5, rtol=2e-5)

    # 4) Per-layer fallback path (taken automatically when resident weights
    #    would exceed the chip's VMEM budget, e.g. big hidden sizes on v7x).
    states3 = jax.block_until_ready(
        mlp_forward(x2, params, batch_tile=128, single_shot_rows=64,
                    compute_dtype=None, force_per_layer=True))
    for got, want in zip(states3, ref_big):
        assert got.shape == want.shape
        assert jnp.allclose(got, want, atol=2e-5, rtol=2e-5)

    # 5) preproc's 1/256 scale folded into W0 (free on the host).
    key, kraw = jax.random.split(key)
    x_raw = jax.random.normal(kraw, (batch, 2, 4, 4), jnp.float32) * 256.0
    x_flat = x_raw.reshape(batch, -1)                  # 2*4*4 == input_dim
    ref_pre = reference(x_flat / 256.0)
    states4 = jax.block_until_ready(
        mlp_forward(x_flat, params, compute_dtype=None, input_scale=1.0 / 256.0))
    for got, want in zip(states4, ref_pre):
        assert got.shape == want.shape
        assert jnp.allclose(got, want, atol=2e-5, rtol=2e-5)

    print("KERNEL_OK")
</pallas_src>

<mosaic_0001>
module attributes {stable_mosaic.version = 11 : i64} {
  func.func @_fused_mlp_kernel(%arg0: memref<8x128xf32, #tpu.memory_space<vmem>>, %arg1: memref<128x128xf32, #tpu.memory_space<vmem>>, %arg2: memref<1x128xf32, #tpu.memory_space<vmem>>, %arg3: memref<128x128xf32, #tpu.memory_space<vmem>>, %arg4: memref<1x128xf32, #tpu.memory_space<vmem>>, %arg5: memref<128x128xf32, #tpu.memory_space<vmem>>, %arg6: memref<1x128xf32, #tpu.memory_space<vmem>>, %arg7: memref<8x128xf32, #tpu.memory_space<vmem>>, %arg8: memref<8x128xf32, #tpu.memory_space<vmem>>, %arg9: memref<8x128xf32, #tpu.memory_space<vmem>>) attributes {dimension_semantics = [], scalar_prefetch = 0 : i64, scratch_operands = 0 : i64, tpu.core_type = #tpu.core_type<tc>} {
    %c0 = arith.constant 0 : index
    %c0_0 = arith.constant 0 : index
    %0 = vector.load %arg0[%c0, %c0_0] : memref<8x128xf32, #tpu.memory_space<vmem>>, vector<8x128xf32>
    %c0_1 = arith.constant 0 : index
    %c0_2 = arith.constant 0 : index
    %1 = vector.load %arg1[%c0_1, %c0_2] : memref<128x128xf32, #tpu.memory_space<vmem>>, vector<128x128xf32>
    %cst = arith.constant dense<0.000000e+00> : vector<8x128xf32>
    %2 = tpu.matmul %0, %1, %cst {dimension_numbers = #tpu.dot_dimension_numbers<[1], [0], [0], [1], [0, 0, 1, 1], [], []>} : vector<8x128xf32>, vector<128x128xf32>, vector<8x128xf32> -> vector<8x128xf32>
    %c0_3 = arith.constant 0 : index
    %c0_4 = arith.constant 0 : index
    %3 = vector.load %arg2[%c0_3, %c0_4] : memref<1x128xf32, #tpu.memory_space<vmem>>, vector<1x128xf32>
    %4 = vector.broadcast %3 : vector<1x128xf32> to vector<8x128xf32>
    %5 = arith.addf %2, %4 : vector<8x128xf32>
    %cst_5 = arith.constant 0.000000e+00 : f32
    %6 = vector.broadcast %cst_5 : f32 to vector<8x128xf32>
    %7 = arith.maximumf %5, %6 : vector<8x128xf32>
    %c0_6 = arith.constant 0 : index
    %c0_7 = arith.constant 0 : index
    %8 = vector.load %arg7[%c0_6, %c0_7] : memref<8x128xf32, #tpu.memory_space<vmem>>, vector<8x128xf32>
    tpu.vector_store %arg7[%c0_6, %c0_7], %7 {strides = array<i32>} : memref<8x128xf32, #tpu.memory_space<vmem>>, vector<8x128xf32>,
    %c0_8 = arith.constant 0 : index
    %c0_9 = arith.constant 0 : index
    %9 = vector.load %arg3[%c0_8, %c0_9] : memref<128x128xf32, #tpu.memory_space<vmem>>, vector<128x128xf32>
    %cst_10 = arith.constant dense<0.000000e+00> : vector<8x128xf32>
    %10 = tpu.matmul %7, %9, %cst_10 {dimension_numbers = #tpu.dot_dimension_numbers<[1], [0], [0], [1], [0, 0, 1, 1], [], []>} : vector<8x128xf32>, vector<128x128xf32>, vector<8x128xf32> -> vector<8x128xf32>
    %c0_11 = arith.constant 0 : index
    %c0_12 = arith.constant 0 : index
    %11 = vector.load %arg4[%c0_11, %c0_12] : memref<1x128xf32, #tpu.memory_space<vmem>>, vector<1x128xf32>
    %12 = vector.broadcast %11 : vector<1x128xf32> to vector<8x128xf32>
    %13 = arith.addf %10, %12 : vector<8x128xf32>
    %cst_13 = arith.constant 0.000000e+00 : f32
    %14 = vector.broadcast %cst_13 : f32 to vector<8x128xf32>
    %15 = arith.maximumf %13, %14 : vector<8x128xf32>
    %c0_14 = arith.constant 0 : index
    %c0_15 = arith.constant 0 : index
    %16 = vector.load %arg8[%c0_14, %c0_15] : memref<8x128xf32, #tpu.memory_space<vmem>>, vector<8x128xf32>
    tpu.vector_store %arg8[%c0_14, %c0_15], %15 {strides = array<i32>} : memref<8x128xf32, #tpu.memory_space<vmem>>, vector<8x128xf32>,
    %c0_16 = arith.constant 0 : index
    %c0_17 = arith.constant 0 : index
    %17 = vector.load %arg5[%c0_16, %c0_17] : memref<128x128xf32, #tpu.memory_space<vmem>>, vector<128x128xf32>
    %cst_18 = arith.constant dense<0.000000e+00> : vector<8x128xf32>
    %18 = tpu.matmul %15, %17, %cst_18 {dimension_numbers = #tpu.dot_dimension_numbers<[1], [0], [0], [1], [0, 0, 1, 1], [], []>} : vector<8x128xf32>, vector<128x128xf32>, vector<8x128xf32> -> vector<8x128xf32>
    %c0_19 = arith.constant 0 : index
    %c0_20 = arith.constant 0 : index
    %19 = vector.load %arg6[%c0_19, %c0_20] : memref<1x128xf32, #tpu.memory_space<vmem>>, vector<1x128xf32>
    %20 = vector.broadcast %19 : vector<1x128xf32> to vector<8x128xf32>
    %21 = arith.addf %18, %20 : vector<8x128xf32>
    %c0_21 = arith.constant 0 : index
    %c0_22 = arith.constant 0 : index
    %22 = vector.load %arg9[%c0_21, %c0_22] : memref<8x128xf32, #tpu.memory_space<vmem>>, vector<8x128xf32>
    tpu.vector_store %arg9[%c0_21, %c0_22], %21 {strides = array<i32>} : memref<8x128xf32, #tpu.memory_space<vmem>>, vector<8x128xf32>,
    return
  }
}

</mosaic_0001>

<llo_original>
// kernel: tpu_custom_call.1
$region0: #{tpu_custom_call.1}
  #allocation0 [shape = 'u32[]', space=smem, size = 0x4, offset = 0x4, fixed_abs, tag = 'smem constant byte address 0x4 - core index']
  #allocation1 [shape = 'u32[144,128]{1,0:T(1,128)}', space=vmem, size = 0x12000, scoped, tag = 'internal scratch']
  %s0 = inlined_call_operand.hbm [shape: f32[8,128], index: 0, kind: input, shape index: {}]
  %s1 = inlined_call_operand.hbm [shape: f32[128,128], index: 1, kind: input, shape index: {}]
  %s2 = inlined_call_operand.vmem [shape: f32[1,128], index: 2, kind: input, shape index: {}]
  %s3 = inlined_call_operand.hbm [shape: f32[128,128], index: 3, kind: input, shape index: {}]
  %s4 = inlined_call_operand.vmem [shape: f32[1,128], index: 4, kind: input, shape index: {}]
  %s5 = inlined_call_operand.hbm [shape: f32[128,128], index: 5, kind: input, shape index: {}]
  %s6 = inlined_call_operand.vmem [shape: f32[1,128], index: 6, kind: input, shape index: {}]
  %s7 = inlined_call_operand.hbm [shape: f32[8,128], index: 7, kind: output, shape index: {0}]
  %s8 = inlined_call_operand.hbm [shape: f32[8,128], index: 8, kind: output, shape index: {1}]
  %s9 = inlined_call_operand.hbm [shape: f32[8,128], index: 9, kind: output, shape index: {2}]
  %10 = xla_tuple %s7, %s8, %s9
  %s11 = sld [smem:[#allocation0]]
  $region70: #{tpu_custom_call.1} parent=0
    _
  %s13 = ssub.s32 1, %s11
  %s14 = scalar_select 0, %s13, %s11
  $region1: #{tpu_custom_call.1} parent=0
    #allocation2 [shape = 'u8[4096]{0}', space=vmem, size = 0x1000, scoped, tag = 'input window, operand 0, single buffered']
    #allocation3 [shape = 's32[1]{0}', space=sflag, size = 0x4, scoped, tag = 'scoped memory for tpu_custom_call.1']
    #allocation4 [shape = 's32[1]{0}', space=sflag, size = 0x4, scoped, tag = 'scoped memory for tpu_custom_call.1']
    #allocation5 [shape = 'u8[65536]{0}', space=vmem, size = 0x10000, scoped, tag = 'input window, operand 1, single buffered']
    #allocation6 [shape = 's32[1]{0}', space=sflag, size = 0x4, scoped, tag = 'scoped memory for tpu_custom_call.1']
    #allocation7 [shape = 'u8[65536]{0}', space=vmem, size = 0x10000, scoped, tag = 'input window, operand 3, single buffered']
    #allocation8 [shape = 'u8[65536]{0}', space=vmem, size = 0x10000, scoped, tag = 'input window, operand 5, single buffered']
    #allocation9 [shape = 's32[1]{0}', space=sflag, size = 0x4, scoped, tag = 'scoped memory for tpu_custom_call.1']
    #allocation10 [shape = 'u8[4096]{0}', space=vmem, size = 0x1000, scoped, tag = 'output window, operand 0, single buffered']
    #allocation11 [shape = 'u8[4096]{0}', space=vmem, size = 0x1000, scoped, tag = 'output window, operand 1, single buffered']
    #allocation12 [shape = 's32[1]{0}', space=sflag, size = 0x4, scoped, tag = 'scoped memory for tpu_custom_call.1']
    #allocation13 [shape = 'u8[4096]{0}', space=vmem, size = 0x1000, scoped, tag = 'output window, operand 2, single buffered']
    %15 = vsyncpa [#allocation3], 0
    %16 = vsyncpa [#allocation6], 0
    %17 = vsyncpa [#allocation9], 0
    %18 = vsyncpa [#allocation4], 0
    %19 = vsyncpa [#allocation12], 0
    // Predicated region
    $region2: #{tpu_custom_call.1} parent=1 // pred_check
      _
    $region3: #{tpu_custom_call.1} parent=1 // pred_check_branch
      %21 = sbr.rel (0) target = $region5
    $region4: #{tpu_custom_call.1} parent=1 // pred_region
      %s23 = ssub.s32 128, 128
      %24 = vsyncadd [#allocation3], %s23
      %s26 = sshll.u32 [#allocation2], 4
      %s27 = int_to_ptr.vmem [resolvable:$true] %s26
      %29 = dma.hbm_to_vmem [thread:$0]  %s0, 128, %s27, [#allocation3]
    $region5: #{tpu_custom_call.1} parent=1 // pred_fallthru
      _
    // Predicated region
    $region6: #{tpu_custom_call.1} parent=1 // pred_check
      _
    $region7: #{tpu_custom_call.1} parent=1 // pred_check_branch
      %31 = sbr.rel (0) target = $region9
    $region8: #{tpu_custom_call.1} parent=1 // pred_region
      %s33 = ssub.s32 2048, 2048
      %34 = vsyncadd [#allocation6], %s33
      %s35 = sshll.u32 [#allocation5], 4
      %s36 = int_to_ptr.vmem [resolvable:$true] %s35
      %41 = dma.hbm_to_vmem [thread:$0]  %s1, 2048, %s36, [#allocation6], 128, 128, 8
    $region9: #{tpu_custom_call.1} parent=1 // pred_fallthru
      _
    // Predicated region
    $region10: #{tpu_custom_call.1} parent=1 // pred_check
      _
    $region11: #{tpu_custom_call.1} parent=1 // pred_check_branch
      %43 = sbr.rel (0) target = $region13
    $region12: #{tpu_custom_call.1} parent=1 // pred_region
      _
    $region13: #{tpu_custom_call.1} parent=1 // pred_fallthru
      _
    // Predicated region
    $region14: #{tpu_custom_call.1} parent=1 // pred_check
      _
    $region15: #{tpu_custom_call.1} parent=1 // pred_check_branch
      %45 = sbr.rel (0) target = $region17
    $region16: #{tpu_custom_call.1} parent=1 // pred_region
      %s47 = ssub.s32 2048, 2048
      %48 = vsyncadd [#allocation6], %s47
      %s49 = sshll.u32 [#allocation7], 4
      %s50 = int_to_ptr.vmem [resolvable:$true] %s49
      %55 = dma.hbm_to_vmem [thread:$0]  %s3, 2048, %s50, [#allocation6], 128, 128, 8
    $region17: #{tpu_custom_call.1} parent=1 // pred_fallthru
      _
    // Predicated region
    $region18: #{tpu_custom_call.1} parent=1 // pred_check
      _
    $region19: #{tpu_custom_call.1} parent=1 // pred_check_branch
      %57 = sbr.rel (0) target = $region21
    $region20: #{tpu_custom_call.1} parent=1 // pred_region
      _
    $region21: #{tpu_custom_call.1} parent=1 // pred_fallthru
      _
    // Predicated region
    $region22: #{tpu_custom_call.1} parent=1 // pred_check
      _
    $region23: #{tpu_custom_call.1} parent=1 // pred_check_branch
      %59 = sbr.rel (0) target = $region25
    $region24: #{tpu_custom_call.1} parent=1 // pred_region
      %s61 = ssub.s32 2048, 2048
      %62 = vsyncadd [#allocation9], %s61
      %s63 = sshll.u32 [#allocation8], 4
      %s64 = int_to_ptr.vmem [resolvable:$true] %s63
      %69 = dma.hbm_to_vmem [thread:$0]  %s5, 2048, %s64, [#allocation9], 128, 128, 8
    $region25: #{tpu_custom_call.1} parent=1 // pred_fallthru
      _
    // Predicated region
    $region26: #{tpu_custom_call.1} parent=1 // pred_check
      _
    $region27: #{tpu_custom_call.1} parent=1 // pred_check_branch
      %71 = sbr.rel (0) target = $region29
    $region28: #{tpu_custom_call.1} parent=1 // pred_region
      _
    $region29: #{tpu_custom_call.1} parent=1 // pred_fallthru
      _
    // Predicated region
    $region30: #{tpu_custom_call.1} parent=1 // pred_check
      _
    $region31: #{tpu_custom_call.1} parent=1 // pred_check_branch
      %73 = sbr.rel (0) target = $region33
    $region32: #{tpu_custom_call.1} parent=1 // pred_region
      %74 = dma.done [#allocation3], 128
    $region33: #{tpu_custom_call.1} parent=1 // pred_fallthru
      _
    // Predicated region
    $region34: #{tpu_custom_call.1} parent=1 // pred_check
      _
    $region35: #{tpu_custom_call.1} parent=1 // pred_check_branch
      %76 = sbr.rel (0) target = $region37
    $region36: #{tpu_custom_call.1} parent=1 // pred_region
      %77 = dma.done [#allocation6], 2048
    $region37: #{tpu_custom_call.1} parent=1 // pred_fallthru
      _
    // Predicated region
    $region38: #{tpu_custom_call.1} parent=1 // pred_check
      _
    $region39: #{tpu_custom_call.1} parent=1 // pred_check_branch
      %79 = sbr.rel (0) target = $region41
    $region40: #{tpu_custom_call.1} parent=1 // pred_region
      %80 = dma.done [#allocation6], 2048
    $region41: #{tpu_custom_call.1} parent=1 // pred_fallthru
      _
    // Predicated region
    $region42: #{tpu_custom_call.1} parent=1 // pred_check
      _
    $region43: #{tpu_custom_call.1} parent=1 // pred_check_branch
      %82 = sbr.rel (0) target = $region45
    $region44: #{tpu_custom_call.1} parent=1 // pred_region
      %83 = dma.done [#allocation9], 2048
    $region45: #{tpu_custom_call.1} parent=1 // pred_fallthru
      _
    %v84 = vld [vmem:[#allocation2] sm:$0xff]
    %v85 = vld [vmem:[#allocation5] sm:$0xff]
    %v86 = vld [vmem:[#allocation5 + $0x8] sm:$0xff]
    %v87 = vld [vmem:[#allocation5 + $0x10] sm:$0xff]
    %v88 = vld [vmem:[#allocation5 + $0x18] sm:$0xff]
    %v89 = vld [vmem:[#allocation5 + $0x20] sm:$0xff]
    %v90 = vld [vmem:[#allocation5 + $0x28] sm:$0xff]
    %v91 = vld [vmem:[#allocation5 + $0x30] sm:$0xff]
    %v92 = vld [vmem:[#allocation5 + $0x38] sm:$0xff]
    %v93 = vld [vmem:[#allocation5 + $0x40] sm:$0xff]
    %v94 = vld [vmem:[#allocation5 + $0x48] sm:$0xff]
    %v95 = vld [vmem:[#allocation5 + $0x50] sm:$0xff]
    %v96 = vld [vmem:[#allocation5 + $0x58] sm:$0xff]
    %v97 = vld [vmem:[#allocation5 + $0x60] sm:$0xff]
    %v98 = vld [vmem:[#allocation5 + $0x68] sm:$0xff]
    %v99 = vld [vmem:[#allocation5 + $0x70] sm:$0xff]
    %v100 = vld [vmem:[#allocation5 + $0x78] sm:$0xff]
    %v101 = vld [vmem:[%s2] sm:$0x1]
    %v103 = vlaneseq
    %v104 = vshrl.u32 %v103, 7
    %v105 = vsub.s32 0, %v104
    %v106 = vrot.slane %v101, %v105
    %108 = vmatprep.subr.mxu0 0.0
    %109 = vmatpush1.msra.mxu0 %v85
    %110 = vmatprep.subr.mxu0 0.0
    %111 = vmatpush1.msra.mxu0 %v86
    %112 = vmatprep.subr.mxu0 0.0
    %113 = vmatpush1.msra.mxu0 %v87
    %114 = vmatprep.subr.mxu0 0.0
    %115 = vmatpush1.msra.mxu0 %v88
    %116 = vmatprep.subr.mxu0 0.0
    %117 = vmatpush1.msra.mxu0 %v89
    %118 = vmatprep.subr.mxu0 0.0
    %119 = vmatpush1.msra.mxu0 %v90
    %120 = vmatprep.subr.mxu0 0.0
    %121 = vmatpush1.msra.mxu0 %v91
    %122 = vmatprep.subr.mxu0 0.0
    %123 = vmatpush1.msra.mxu0 %v92
    %124 = vmatprep.subr.mxu0 0.0
    %125 = vmatpush1.msra.mxu0 %v93
    %126 = vmatprep.subr.mxu0 0.0
    %127 = vmatpush1.msra.mxu0 %v94
    %128 = vmatprep.subr.mxu0 0.0
    %129 = vmatpush1.msra.mxu0 %v95
    %130 = vmatprep.subr.mxu0 0.0
    %131 = vmatpush1.msra.mxu0 %v96
    %132 = vmatprep.subr.mxu0 0.0
    %133 = vmatpush1.msra.mxu0 %v97
    %134 = vmatprep.subr.mxu0 0.0
    %135 = vmatpush1.msra.mxu0 %v98
    %136 = vmatprep.subr.mxu0 0.0
    %137 = vmatpush1.msra.mxu0 %v99
    %138 = vmatprep.subr.mxu0 0.0
    %139 = vmatpush1.msra.mxu0 %v100
    %140 = vmatprep.subr.mxu0 0.0
    %141 = vmatpush1.msra.mxu0 0.0
    %142 = vmatprep.subr.mxu0 0.0
    %143 = vmatpush1.msra.mxu0 0.0
    %144 = vmatprep.subr.mxu0 0.0
    %145 = vmatpush1.msra.mxu0 0.0
    %146 = vmatprep.subr.mxu0 0.0
    %147 = vmatpush1.msra.mxu0 0.0
    %148 = vmatprep.subr.mxu0 0.0
    %149 = vmatpush1.msra.mxu0 0.0
    %150 = vmatprep.subr.mxu0 0.0
    %151 = vmatpush1.msra.mxu0 0.0
    %152 = vmatprep.subr.mxu0 0.0
    %153 = vmatpush1.msra.mxu0 0.0
    %154 = vmatprep.subr.mxu0 0.0
    %155 = vmatpush1.msra.mxu0 0.0
    %156 = vmatprep.subr.mxu0 0.0
    %157 = vmatpush1.msra.mxu0 0.0
    %158 = vmatprep.subr.mxu0 0.0
    %159 = vmatpush1.msra.mxu0 0.0
    %160 = vmatprep.subr.mxu0 0.0
    %161 = vmatpush1.msra.mxu0 0.0
    %162 = vmatprep.subr.mxu0 0.0
    %163 = vmatpush1.msra.mxu0 0.0
    %164 = vmatprep.subr.mxu0 0.0
    %165 = vmatpush1.msra.mxu0 0.0
    %166 = vmatprep.subr.mxu0 0.0
    %167 = vmatpush1.msra.mxu0 0.0
    %168 = vmatprep.subr.mxu0 0.0
    %169 = vmatpush1.msra.mxu0 0.0
    %170 = vmatprep.subr.mxu0 0.0
    %171 = vmatpush1.msra.mxu0 0.0
    %172 = vmatprep.mubr.f32.mxu0 0.0
    %173 = vmatmul.mubr.f32.gmra.mrb[0].mxu0 %v84
    %v174 = vpop.f32.mrb[0].mxu0
    %v175 = vadd.f32 %v106, %v174
    %v176 = vpop.f32.mrb[0].mxu0
    %177 = vdwg.mxu0
    %v178 = vmax.f32 %v175, 0.0
    %179 = vst [vmem:[#allocation10] sm:$0xff] %v178
    %v180 = vld [vmem:[#allocation7] sm:$0xff]
    %v181 = vld [vmem:[#allocation7 + $0x8] sm:$0xff]
    %v182 = vld [vmem:[#allocation7 + $0x10] sm:$0xff]
    %v183 = vld [vmem:[#allocation7 + $0x18] sm:$0xff]
    %v184 = vld [vmem:[#allocation7 + $0x20] sm:$0xff]
    %v185 = vld [vmem:[#allocation7 + $0x28] sm:$0xff]
    %v186 = vld [vmem:[#allocation7 + $0x30] sm:$0xff]
    %v187 = vld [vmem:[#allocation7 + $0x38] sm:$0xff]
    %v188 = vld [vmem:[#allocation7 + $0x40] sm:$0xff]
    %v189 = vld [vmem:[#allocation7 + $0x48] sm:$0xff]
    %v190 = vld [vmem:[#allocation7 + $0x50] sm:$0xff]
    %v191 = vld [vmem:[#allocation7 + $0x58] sm:$0xff]
    %v192 = vld [vmem:[#allocation7 + $0x60] sm:$0xff]
    %v193 = vld [vmem:[#allocation7 + $0x68] sm:$0xff]
    %v194 = vld [vmem:[#allocation7 + $0x70] sm:$0xff]
    %v195 = vld [vmem:[#allocation7 + $0x78] sm:$0xff]
    %v196 = vld [vmem:[%s4] sm:$0x1]
    %v198 = vlaneseq
    %v199 = vshrl.u32 %v198, 7
    %v200 = vsub.s32 0, %v199
    %v201 = vrot.slane %v196, %v200
    %203 = vmatprep.subr.mxu0 0.0
    %204 = vmatpush1.msra.mxu0 %v180
    %205 = vmatprep.subr.mxu0 0.0
    %206 = vmatpush1.msra.mxu0 %v181
    %207 = vmatprep.subr.mxu0 0.0
    %208 = vmatpush1.msra.mxu0 %v182
    %209 = vmatprep.subr.mxu0 0.0
    %210 = vmatpush1.msra.mxu0 %v183
    %211 = vmatprep.subr.mxu0 0.0
    %212 = vmatpush1.msra.mxu0 %v184
    %213 = vmatprep.subr.mxu0 0.0
    %214 = vmatpush1.msra.mxu0 %v185
    %215 = vmatprep.subr.mxu0 0.0
    %216 = vmatpush1.msra.mxu0 %v186
    %217 = vmatprep.subr.mxu0 0.0
    %218 = vmatpush1.msra.mxu0 %v187
    %219 = vmatprep.subr.mxu0 0.0
    %220 = vmatpush1.msra.mxu0 %v188
    %221 = vmatprep.subr.mxu0 0.0
    %222 = vmatpush1.msra.mxu0 %v189
    %223 = vmatprep.subr.mxu0 0.0
    %224 = vmatpush1.msra.mxu0 %v190
    %225 = vmatprep.subr.mxu0 0.0
    %226 = vmatpush1.msra.mxu0 %v191
    %227 = vmatprep.subr.mxu0 0.0
    %228 = vmatpush1.msra.mxu0 %v192
    %229 = vmatprep.subr.mxu0 0.0
    %230 = vmatpush1.msra.mxu0 %v193
    %231 = vmatprep.subr.mxu0 0.0
    %232 = vmatpush1.msra.mxu0 %v194
    %233 = vmatprep.subr.mxu0 0.0
    %234 = vmatpush1.msra.mxu0 %v195
    %235 = vmatprep.subr.mxu0 0.0
    %236 = vmatpush1.msra.mxu0 0.0
    %237 = vmatprep.subr.mxu0 0.0
    %238 = vmatpush1.msra.mxu0 0.0
    %239 = vmatprep.subr.mxu0 0.0
    %240 = vmatpush1.msra.mxu0 0.0
    %241 = vmatprep.subr.mxu0 0.0
    %242 = vmatpush1.msra.mxu0 0.0
    %243 = vmatprep.subr.mxu0 0.0
    %244 = vmatpush1.msra.mxu0 0.0
    %245 = vmatprep.subr.mxu0 0.0
    %246 = vmatpush1.msra.mxu0 0.0
    %247 = vmatprep.subr.mxu0 0.0
    %248 = vmatpush1.msra.mxu0 0.0
    %249 = vmatprep.subr.mxu0 0.0
    %250 = vmatpush1.msra.mxu0 0.0
    %251 = vmatprep.subr.mxu0 0.0
    %252 = vmatpush1.msra.mxu0 0.0
    %253 = vmatprep.subr.mxu0 0.0
    %254 = vmatpush1.msra.mxu0 0.0
    %255 = vmatprep.subr.mxu0 0.0
    %256 = vmatpush1.msra.mxu0 0.0
    %257 = vmatprep.subr.mxu0 0.0
    %258 = vmatpush1.msra.mxu0 0.0
    %259 = vmatprep.subr.mxu0 0.0
    %260 = vmatpush1.msra.mxu0 0.0
    %261 = vmatprep.subr.mxu0 0.0
    %262 = vmatpush1.msra.mxu0 0.0
    %263 = vmatprep.subr.mxu0 0.0
    %264 = vmatpush1.msra.mxu0 0.0
    %265 = vmatprep.subr.mxu0 0.0
    %266 = vmatpush1.msra.mxu0 0.0
    %267 = vmatprep.mubr.f32.mxu0 0.0
    %268 = vmatmul.mubr.f32.gmra.mrb[0].mxu0 %v178
    %v269 = vpop.f32.mrb[0].mxu0
    %v270 = vadd.f32 %v201, %v269
    %v271 = vpop.f32.mrb[0].mxu0
    %272 = vdwg.mxu0
    %v273 = vmax.f32 %v270, 0.0
    %274 = vst [vmem:[#allocation11] sm:$0xff] %v273
    %v275 = vld [vmem:[#allocation8] sm:$0xff]
    %v276 = vld [vmem:[#allocation8 + $0x8] sm:$0xff]
    %v277 = vld [vmem:[#allocation8 + $0x10] sm:$0xff]
    %v278 = vld [vmem:[#allocation8 + $0x18] sm:$0xff]
    %v279 = vld [vmem:[#allocation8 + $0x20] sm:$0xff]
    %v280 = vld [vmem:[#allocation8 + $0x28] sm:$0xff]
    %v281 = vld [vmem:[#allocation8 + $0x30] sm:$0xff]
    %v282 = vld [vmem:[#allocation8 + $0x38] sm:$0xff]
    %v283 = vld [vmem:[#allocation8 + $0x40] sm:$0xff]
    %v284 = vld [vmem:[#allocation8 + $0x48] sm:$0xff]
    %v285 = vld [vmem:[#allocation8 + $0x50] sm:$0xff]
    %v286 = vld [vmem:[#allocation8 + $0x58] sm:$0xff]
    %v287 = vld [vmem:[#allocation8 + $0x60] sm:$0xff]
    %v288 = vld [vmem:[#allocation8 + $0x68] sm:$0xff]
    %v289 = vld [vmem:[#allocation8 + $0x70] sm:$0xff]
    %v290 = vld [vmem:[#allocation8 + $0x78] sm:$0xff]
    %v291 = vld [vmem:[%s6] sm:$0x1]
    %v293 = vlaneseq
    %v294 = vshrl.u32 %v293, 7
    %v295 = vsub.s32 0, %v294
    %v296 = vrot.slane %v291, %v295
    %298 = vmatprep.subr.mxu0 0.0
    %299 = vmatpush1.msra.mxu0 %v275
    %300 = vmatprep.subr.mxu0 0.0
    %301 = vmatpush1.msra.mxu0 %v276
    %302 = vmatprep.subr.mxu0 0.0
    %303 = vmatpush1.msra.mxu0 %v277
    %304 = vmatprep.subr.mxu0 0.0
    %305 = vmatpush1.msra.mxu0 %v278
    %306 = vmatprep.subr.mxu0 0.0
    %307 = vmatpush1.msra.mxu0 %v279
    %308 = vmatprep.subr.mxu0 0.0
    %309 = vmatpush1.msra.mxu0 %v280
    %310 = vmatprep.subr.mxu0 0.0
    %311 = vmatpush1.msra.mxu0 %v281
    %312 = vmatprep.subr.mxu0 0.0
    %313 = vmatpush1.msra.mxu0 %v282
    %314 = vmatprep.subr.mxu0 0.0
    %315 = vmatpush1.msra.mxu0 %v283
    %316 = vmatprep.subr.mxu0 0.0
    %317 = vmatpush1.msra.mxu0 %v284
    %318 = vmatprep.subr.mxu0 0.0
    %319 = vmatpush1.msra.mxu0 %v285
    %320 = vmatprep.subr.mxu0 0.0
    %321 = vmatpush1.msra.mxu0 %v286
    %322 = vmatprep.subr.mxu0 0.0
    %323 = vmatpush1.msra.mxu0 %v287
    %324 = vmatprep.subr.mxu0 0.0
    %325 = vmatpush1.msra.mxu0 %v288
    %326 = vmatprep.subr.mxu0 0.0
    %327 = vmatpush1.msra.mxu0 %v289
    %328 = vmatprep.subr.mxu0 0.0
    %329 = vmatpush1.msra.mxu0 %v290
    %330 = vmatprep.subr.mxu0 0.0
    %331 = vmatpush1.msra.mxu0 0.0
    %332 = vmatprep.subr.mxu0 0.0
    %333 = vmatpush1.msra.mxu0 0.0
    %334 = vmatprep.subr.mxu0 0.0
    %335 = vmatpush1.msra.mxu0 0.0
    %336 = vmatprep.subr.mxu0 0.0
    %337 = vmatpush1.msra.mxu0 0.0
    %338 = vmatprep.subr.mxu0 0.0
    %339 = vmatpush1.msra.mxu0 0.0
    %340 = vmatprep.subr.mxu0 0.0
    %341 = vmatpush1.msra.mxu0 0.0
    %342 = vmatprep.subr.mxu0 0.0
    %343 = vmatpush1.msra.mxu0 0.0
    %344 = vmatprep.subr.mxu0 0.0
    %345 = vmatpush1.msra.mxu0 0.0
    %346 = vmatprep.subr.mxu0 0.0
    %347 = vmatpush1.msra.mxu0 0.0
    %348 = vmatprep.subr.mxu0 0.0
    %349 = vmatpush1.msra.mxu0 0.0
    %350 = vmatprep.subr.mxu0 0.0
    %351 = vmatpush1.msra.mxu0 0.0
    %352 = vmatprep.subr.mxu0 0.0
    %353 = vmatpush1.msra.mxu0 0.0
    %354 = vmatprep.subr.mxu0 0.0
    %355 = vmatpush1.msra.mxu0 0.0
    %356 = vmatprep.subr.mxu0 0.0
    %357 = vmatpush1.msra.mxu0 0.0
    %358 = vmatprep.subr.mxu0 0.0
    %359 = vmatpush1.msra.mxu0 0.0
    %360 = vmatprep.subr.mxu0 0.0
    %361 = vmatpush1.msra.mxu0 0.0
    %362 = vmatprep.mubr.f32.mxu0 0.0
    %363 = vmatmul.mubr.f32.gmra.mrb[0].mxu0 %v273
    %v364 = vpop.f32.mrb[0].mxu0
    %v365 = vadd.f32 %v296, %v364
    %v366 = vpop.f32.mrb[0].mxu0
    %367 = vdwg.mxu0
    %368 = vst [vmem:[#allocation13] sm:$0xff] %v365
    // Predicated region
    $region46: #{tpu_custom_call.1} parent=1 // pred_check
      _
    $region47: #{tpu_custom_call.1} parent=1 // pred_check_branch
      %370 = sbr.rel (0) target = $region49
    $region48: #{tpu_custom_call.1} parent=1 // pred_region
      %s372 = ssub.s32 128, 128
      %373 = vsyncadd [#allocation4], %s372
      %s375 = sshll.u32 [#allocation10], 4
      %s376 = int_to_ptr.vmem [resolvable:$true] %s375
      %378 = dma.vmem_to_hbm [thread:$0]  %s376, 128, %s7, [#allocation4]
    $region49: #{tpu_custom_call.1} parent=1 // pred_fallthru
      _
    // Predicated region
    $region50: #{tpu_custom_call.1} parent=1 // pred_check
      _
    $region51: #{tpu_custom_call.1} parent=1 // pred_check_branch
      %380 = sbr.rel (0) target = $region53
    $region52: #{tpu_custom_call.1} parent=1 // pred_region
      %s382 = ssub.s32 128, 128
      %383 = vsyncadd [#allocation12], %s382
      %s385 = sshll.u32 [#allocation11], 4
      %s386 = int_to_ptr.vmem [resolvable:$true] %s385
      %388 = dma.vmem_to_hbm [thread:$0]  %s386, 128, %s8, [#allocation12]
    $region53: #{tpu_custom_call.1} parent=1 // pred_fallthru
      _
    // Predicated region
    $region54: #{tpu_custom_call.1} parent=1 // pred_check
      _
    $region55: #{tpu_custom_call.1} parent=1 // pred_check_branch
      %390 = sbr.rel (0) target = $region57
    $region56: #{tpu_custom_call.1} parent=1 // pred_region
      %s392 = ssub.s32 128, 128
      %393 = vsyncadd [#allocation12], %s392
      %s395 = sshll.u32 [#allocation13], 4
      %s396 = int_to_ptr.vmem [resolvable:$true] %s395
      %398 = dma.vmem_to_hbm [thread:$0]  %s396, 128, %s9, [#allocation12]
    $region57: #{tpu_custom_call.1} parent=1 // pred_fallthru
      _
    // Predicated region
    $region58: #{tpu_custom_call.1} parent=1 // pred_check
      _
    $region59: #{tpu_custom_call.1} parent=1 // pred_check_branch
      %400 = sbr.rel (0) target = $region61
    $region60: #{tpu_custom_call.1} parent=1 // pred_region
      %401 = dma.done [#allocation4], 128
    $region61: #{tpu_custom_call.1} parent=1 // pred_fallthru
      _
    // Predicated region
    $region62: #{tpu_custom_call.1} parent=1 // pred_check
      _
    $region63: #{tpu_custom_call.1} parent=1 // pred_check_branch
      %403 = sbr.rel (0) target = $region65
    $region64: #{tpu_custom_call.1} parent=1 // pred_region
      %404 = dma.done [#allocation12], 128
    $region65: #{tpu_custom_call.1} parent=1 // pred_fallthru
      _
    // Predicated region
    $region66: #{tpu_custom_call.1} parent=1 // pred_check
      _
    $region67: #{tpu_custom_call.1} parent=1 // pred_check_branch
      %406 = sbr.rel (0) target = $region69
    $region68: #{tpu_custom_call.1} parent=1 // pred_region
      %407 = dma.done [#allocation12], 128
    $region69: #{tpu_custom_call.1} parent=1 // pred_fallthru
      _
    %408 = vsyncpa [#allocation3], 1
    %409 = vsyncpa [#allocation6], 1
    %410 = vsyncpa [#allocation9], 1
    %411 = vsyncpa [#allocation4], 1
    %412 = vsyncpa [#allocation12], 1

</llo_original>
